<compile_context>
chip_gen: v6e
topology: v6e:2x2x1
jax: 0.10.0
libtpu: 0.0.40
codegen_flags: <defaults>
</compile_context>

<pallas_src>
import jax
import jax.numpy as jnp
from jax import lax
from jax.experimental import pallas as pl
from jax.experimental.pallas import tpu as pltpu

LN_EPS = 1e-5                       # PyTorch nn.LayerNorm default
_VMEM_LIMIT = 32 * 1024 * 1024      # explicit, safe on v5e/v6e/v7x


def _round_up(v, m):
    return ((v + m - 1) // m) * m


def _row_tile(rows, width_f32_cols, itemsize, *, max_rows=512,
              budget_bytes=8 * 1024 * 1024):
    """Pick a row-tile size: as large as possible within a VMEM budget,
    a multiple of the sublane packing granularity, capped near `rows`."""
    gran = 16 if itemsize == 2 else 8          # bf16 packs 2 rows / sublane
    per_row = 4 * width_f32_cols * 4           # ~2x double-buffered in+out, f32
    t = min(max_rows, max(gran, budget_bytes // max(per_row, 1)))
    t = min(t, _round_up(rows, gran))
    return max(gran, (t // gran) * gran)


# ----------------------------- LayerNorm kernel ------------------------------
def _layernorm_kernel(x_ref, g_ref, b_ref, o_ref):
    x = x_ref[...].astype(jnp.float32)                        # (tile_rows, D)
    mean = jnp.mean(x, axis=-1, keepdims=True)
    c = x - mean
    var = jnp.mean(c * c, axis=-1, keepdims=True)
    y = c * lax.rsqrt(var + LN_EPS)
    y = y * g_ref[...].astype(jnp.float32) + b_ref[...].astype(jnp.float32)
    o_ref[...] = y.astype(o_ref.dtype)


def layernorm(x, gamma, beta):
    """LayerNorm over last axis of x:(B, N, D)."""
    B, N, D = x.shape
    rows = B * N
    x2 = x.reshape(rows, D)
    tile_rows = _row_tile(rows, D, x.dtype.itemsize)
    grid_m = pl.cdiv(rows, tile_rows)

    out = pl.pallas_call(
        _layernorm_kernel,
        out_shape=jax.ShapeDtypeStruct((rows, D), x.dtype),
        grid_spec=pltpu.PrefetchScalarGridSpec(
            num_scalar_prefetch=0,
            grid=(grid_m,),
            in_specs=[
                pl.BlockSpec((tile_rows, D), lambda i: (i, 0)),
                pl.BlockSpec((1, D), lambda i: (0, 0)),
                pl.BlockSpec((1, D), lambda i: (0, 0)),
            ],
            out_specs=pl.BlockSpec((tile_rows, D), lambda i: (i, 0)),
        ),
        compiler_params=pltpu.CompilerParams(
            dimension_semantics=("parallel",),
            vmem_limit_bytes=_VMEM_LIMIT),
    )(x2, gamma.reshape(1, D), beta.reshape(1, D))
    return out.reshape(B, N, D)


# -------------------- Fused PreNorm + Linear (LN -> matmul) ------------------
def _prenorm_linear_kernel(x_ref, g_ref, b_ref, w_ref, bias_ref, o_ref, xn_ref):
    # LayerNorm the row tile once (only on the first Dout tile); keep the
    # normalized rows resident in VMEM scratch across the Dout grid axis.
    @pl.when(pl.program_id(1) == 0)
    def _():
        x = x_ref[...].astype(jnp.float32)
        mean = jnp.mean(x, axis=-1, keepdims=True)
        c = x - mean
        var = jnp.mean(c * c, axis=-1, keepdims=True)
        xn = c * lax.rsqrt(var + LN_EPS)
        xn = xn * g_ref[...].astype(jnp.float32) + b_ref[...].astype(jnp.float32)
        xn_ref[...] = xn.astype(xn_ref.dtype)

    acc = jnp.dot(xn_ref[...], w_ref[...].astype(xn_ref.dtype),
                  preferred_element_type=jnp.float32)
    acc = acc + bias_ref[...].astype(jnp.float32)
    o_ref[...] = acc.astype(o_ref.dtype)


def prenorm_linear(x, gamma, beta, w, b):
    """fn(LayerNorm(x)) with fn = Linear(w, b), fused in one pallas_call.

    x: (B, N, D), w: (D, Dout), b: (Dout,).  LN output never touches HBM.
    """
    B, N, D = x.shape
    Dout = w.shape[1]
    rows = B * N
    x2 = x.reshape(rows, D)

    tile_n = Dout if Dout <= 512 else 512            # full or a 128-multiple
    tile_m = _row_tile(rows, D + tile_n, x.dtype.itemsize, max_rows=256)
    grid_m = pl.cdiv(rows, tile_m)
    grid_n = pl.cdiv(Dout, tile_n)

    out = pl.pallas_call(
        _prenorm_linear_kernel,
        out_shape=jax.ShapeDtypeStruct((rows, Dout), x.dtype),
        grid_spec=pltpu.PrefetchScalarGridSpec(
            num_scalar_prefetch=0,
            grid=(grid_m, grid_n),
            in_specs=[
                pl.BlockSpec((tile_m, D), lambda i, j: (i, 0)),   # x rows
                pl.BlockSpec((1, D), lambda i, j: (0, 0)),        # gamma
                pl.BlockSpec((1, D), lambda i, j: (0, 0)),        # beta
                pl.BlockSpec((D, tile_n), lambda i, j: (0, j)),   # w
                pl.BlockSpec((1, tile_n), lambda i, j: (0, j)),   # bias
            ],
            out_specs=pl.BlockSpec((tile_m, tile_n), lambda i, j: (i, j)),
            scratch_shapes=[pltpu.VMEM((tile_m, D), x.dtype)],
        ),
        compiler_params=pltpu.CompilerParams(
            # row axis parallel (megacore on v7x); Dout axis carries the LN
            # scratch across iterations -> must stay sequential.
            dimension_semantics=("parallel", "arbitrary"),
            vmem_limit_bytes=_VMEM_LIMIT),
    )(x2, gamma.reshape(1, D), beta.reshape(1, D), w, b.reshape(1, Dout))
    return out.reshape(B, N, Dout)


# ------------------------------ Tiled Linear ---------------------------------
def _linear_kernel(x_ref, w_ref, b_ref, o_ref):
    acc = jnp.dot(x_ref[...], w_ref[...].astype(x_ref.dtype),
                  preferred_element_type=jnp.float32)
    o_ref[...] = (acc + b_ref[...].astype(jnp.float32)).astype(o_ref.dtype)


def linear(x, w, b):
    """y = x @ w + b, tiled over rows and Dout (K kept whole in VMEM)."""
    B, N, D = x.shape
    Dout = w.shape[1]
    rows = B * N
    x2 = x.reshape(rows, D)

    tile_n = Dout if Dout <= 512 else 512
    tile_m = _row_tile(rows, D + tile_n, x.dtype.itemsize, max_rows=256)
    grid_m = pl.cdiv(rows, tile_m)
    grid_n = pl.cdiv(Dout, tile_n)

    out = pl.pallas_call(
        _linear_kernel,
        out_shape=jax.ShapeDtypeStruct((rows, Dout), x.dtype),
        grid_spec=pltpu.PrefetchScalarGridSpec(
            num_scalar_prefetch=0,
            grid=(grid_m, grid_n),
            in_specs=[
                pl.BlockSpec((tile_m, D), lambda i, j: (i, 0)),
                pl.BlockSpec((D, tile_n), lambda i, j: (0, j)),
                pl.BlockSpec((1, tile_n), lambda i, j: (0, j)),
            ],
            out_specs=pl.BlockSpec((tile_m, tile_n), lambda i, j: (i, j)),
        ),
        compiler_params=pltpu.CompilerParams(
            dimension_semantics=("parallel", "parallel"),
            vmem_limit_bytes=_VMEM_LIMIT),
    )(x2, w, b.reshape(1, Dout))
    return out.reshape(B, N, Dout)


class PallasLinear:
    def __init__(self, w, b):
        self.w = w
        self.b = b

    def __call__(self, x):
        return linear(x, self.w, self.b)


# --------------------------------- PreNorm -----------------------------------
class PreNorm:
    """JAX/Pallas equivalent of the PyTorch PreNorm module:
         forward(x, **kwargs) = fn(LayerNorm(x), **kwargs)

    If fn is a PallasLinear (and no kwargs), LN and the matmul are fused into a
    single Pallas kernel; otherwise LN runs as its own kernel and fn is called
    on the result.
    """

    def __init__(self, dim, fn):
        self.dim = dim
        self.fn = fn
        # PyTorch nn.LayerNorm default init: weight = 1, bias = 0
        self.gamma = jnp.ones((dim,), dtype=jnp.float32)
        self.beta = jnp.zeros((dim,), dtype=jnp.float32)

    def __call__(self, x, **kwargs):
        if isinstance(self.fn, PallasLinear) and not kwargs:
            return prenorm_linear(x, self.gamma, self.beta, self.fn.w, self.fn.b)
        return self.fn(layernorm(x, self.gamma, self.beta), **kwargs)


# ----------------------------------- main ------------------------------------
if __name__ == "__main__":
    B, N, D = 2, 8, 128                 # lane-dense feature dim (multiple of 128)
    key = jax.random.PRNGKey(0)
    kx, kw, kb = jax.random.split(key, 3)

    x = jax.random.normal(kx, (B, N, D), dtype=jnp.float32)
    w = jax.random.normal(kw, (D, D), dtype=jnp.float32) * 0.02
    b = jax.random.normal(kb, (D,), dtype=jnp.float32) * 0.02

    # ---- reference (plain JAX) ----
    mean = jnp.mean(x, axis=-1, keepdims=True)
    var = jnp.mean((x - mean) ** 2, axis=-1, keepdims=True)
    x_ln_ref = (x - mean) / jnp.sqrt(var + LN_EPS)
    ref = jnp.einsum("bnd,de->bne", x_ln_ref, w) + b

    # ---- fused path: PreNorm wrapping a PallasLinear ----
    prenorm = PreNorm(D, PallasLinear(w, b))
    out = prenorm(x)
    jax.block_until_ready(out)
    assert out.shape == (B, N, D)
    assert jnp.allclose(out, ref, atol=1e-4, rtol=1e-4), "fused PreNorm mismatch"

    # ---- generic path: standalone LayerNorm kernel + arbitrary fn ----
    prenorm_generic = PreNorm(D, lambda y: linear(y, w, b))
    out2 = prenorm_generic(x)
    jax.block_until_ready(out2)
    assert jnp.allclose(out2, ref, atol=1e-4, rtol=1e-4), "generic PreNorm mismatch"

    ln_out = layernorm(x, prenorm.gamma, prenorm.beta)
    jax.block_until_ready(ln_out)
    assert jnp.allclose(ln_out, x_ln_ref, atol=1e-5, rtol=1e-5), "LayerNorm mismatch"

    print("KERNEL_OK")
</pallas_src>

<mosaic_0001>
module attributes {stable_mosaic.version = 11 : i64} {
  func.func @_prenorm_linear_kernel(%arg0: i32, %arg1: i32, %arg2: memref<16x128xf32, #tpu.memory_space<vmem>>, %arg3: memref<1x128xf32, #tpu.memory_space<vmem>>, %arg4: memref<1x128xf32, #tpu.memory_space<vmem>>, %arg5: memref<128x128xf32, #tpu.memory_space<vmem>>, %arg6: memref<1x128xf32, #tpu.memory_space<vmem>>, %arg7: memref<16x128xf32, #tpu.memory_space<vmem>>, %arg8: memref<16x128xf32, #tpu.memory_space<vmem>>) attributes {dimension_semantics = [#tpu.dimension_semantics<parallel>, #tpu.dimension_semantics<arbitrary>], iteration_bounds = array<i64: 1, 1>, scalar_prefetch = 0 : i64, scratch_operands = 1 : i64, tpu.core_type = #tpu.core_type<tc>, window_params = [{transform_indices = @transform_0, window_bounds = array<i64: 16, 128>}, {pipeline_mode = #tpu.pipeline_mode<synchronous>, transform_indices = @transform_1, window_bounds = array<i64: 1, 128>}, {pipeline_mode = #tpu.pipeline_mode<synchronous>, transform_indices = @transform_2, window_bounds = array<i64: 1, 128>}, {transform_indices = @transform_3, window_bounds = array<i64: 128, 128>}, {transform_indices = @transform_4, window_bounds = array<i64: 1, 128>}, {transform_indices = @transform_5, window_bounds = array<i64: 16, 128>}]} {
    %c0_i32 = arith.constant 0 : i32
    %0 = arith.cmpi eq, %arg1, %c0_i32 : i32
    %1 = arith.extui %0 : i1 to i32
    %c0_i32_0 = arith.constant 0 : i32
    %2 = arith.cmpi ne, %1, %c0_i32_0 : i32
    scf.if %2 {
      %c0_8 = arith.constant 0 : index
      %c0_9 = arith.constant 0 : index
      %10 = vector.load %arg2[%c0_8, %c0_9] : memref<16x128xf32, #tpu.memory_space<vmem>>, vector<16x128xf32>
      %cst_10 = arith.constant dense<0.000000e+00> : vector<16xf32>
      %11 = vector.multi_reduction <add>, %10, %cst_10 [1] : vector<16x128xf32> to vector<16xf32>
      %12 = vector.shape_cast %11 : vector<16xf32> to vector<16x1xf32>
      %cst_11 = arith.constant 1.280000e+02 : f32
      %13 = vector.broadcast %cst_11 : f32 to vector<16x1xf32>
      %14 = arith.divf %12, %13 : vector<16x1xf32>
      %15 = vector.broadcast %14 : vector<16x1xf32> to vector<16x128xf32>
      %16 = arith.subf %10, %15 : vector<16x128xf32>
      %17 = arith.mulf %16, %16 : vector<16x128xf32>
      %cst_12 = arith.constant dense<0.000000e+00> : vector<16xf32>
      %18 = vector.multi_reduction <add>, %17, %cst_12 [1] : vector<16x128xf32> to vector<16xf32>
      %19 = vector.shape_cast %18 : vector<16xf32> to vector<16x1xf32>
      %cst_13 = arith.constant 1.280000e+02 : f32
      %20 = vector.broadcast %cst_13 : f32 to vector<16x1xf32>
      %21 = arith.divf %19, %20 : vector<16x1xf32>
      %cst_14 = arith.constant 9.99999974E-6 : f32
      %22 = vector.broadcast %cst_14 : f32 to vector<16x1xf32>
      %23 = arith.addf %21, %22 : vector<16x1xf32>
      %24 = math.rsqrt %23 : vector<16x1xf32>
      %25 = vector.broadcast %24 : vector<16x1xf32> to vector<16x128xf32>
      %26 = arith.mulf %16, %25 : vector<16x128xf32>
      %c0_15 = arith.constant 0 : index
      %c0_16 = arith.constant 0 : index
      %27 = vector.load %arg3[%c0_15, %c0_16] : memref<1x128xf32, #tpu.memory_space<vmem>>, vector<1x128xf32>
      %28 = vector.broadcast %27 : vector<1x128xf32> to vector<16x128xf32>
      %29 = arith.mulf %26, %28 : vector<16x128xf32>
      %c0_17 = arith.constant 0 : index
      %c0_18 = arith.constant 0 : index
      %30 = vector.load %arg4[%c0_17, %c0_18] : memref<1x128xf32, #tpu.memory_space<vmem>>, vector<1x128xf32>
      %31 = vector.broadcast %30 : vector<1x128xf32> to vector<16x128xf32>
      %32 = arith.addf %29, %31 : vector<16x128xf32>
      %c0_19 = arith.constant 0 : index
      %c0_20 = arith.constant 0 : index
      %33 = vector.load %arg8[%c0_19, %c0_20] : memref<16x128xf32, #tpu.memory_space<vmem>>, vector<16x128xf32>
      tpu.vector_store %arg8[%c0_19, %c0_20], %32 {strides = array<i32>} : memref<16x128xf32, #tpu.memory_space<vmem>>, vector<16x128xf32>,
    } else {
    }
    %c0 = arith.constant 0 : index
    %c0_1 = arith.constant 0 : index
    %3 = vector.load %arg8[%c0, %c0_1] : memref<16x128xf32, #tpu.memory_space<vmem>>, vector<16x128xf32>
    %c0_2 = arith.constant 0 : index
    %c0_3 = arith.constant 0 : index
    %4 = vector.load %arg5[%c0_2, %c0_3] : memref<128x128xf32, #tpu.memory_space<vmem>>, vector<128x128xf32>
    %cst = arith.constant dense<0.000000e+00> : vector<16x128xf32>
    %5 = tpu.matmul %3, %4, %cst {dimension_numbers = #tpu.dot_dimension_numbers<[1], [0], [0], [1], [0, 0, 1, 1], [], []>} : vector<16x128xf32>, vector<128x128xf32>, vector<16x128xf32> -> vector<16x128xf32>
    %c0_4 = arith.constant 0 : index
    %c0_5 = arith.constant 0 : index
    %6 = vector.load %arg6[%c0_4, %c0_5] : memref<1x128xf32, #tpu.memory_space<vmem>>, vector<1x128xf32>
    %7 = vector.broadcast %6 : vector<1x128xf32> to vector<16x128xf32>
    %8 = arith.addf %5, %7 : vector<16x128xf32>
    %c0_6 = arith.constant 0 : index
    %c0_7 = arith.constant 0 : index
    %9 = vector.load %arg7[%c0_6, %c0_7] : memref<16x128xf32, #tpu.memory_space<vmem>>, vector<16x128xf32>
    tpu.vector_store %arg7[%c0_6, %c0_7], %8 {strides = array<i32>} : memref<16x128xf32, #tpu.memory_space<vmem>>, vector<16x128xf32>,
    return
  }
  func.func @transform_0(%arg0: i32, %arg1: i32) -> (i32, i32) {
    %c0_i32 = arith.constant 0 : i32
    %c0_i32_0 = arith.constant 0 : i32
    return %arg0, %c0_i32 : i32, i32
  }
  func.func @transform_1(%arg0: i32, %arg1: i32) -> (i32, i32) {
    %c0_i32 = arith.constant 0 : i32
    %c0_i32_0 = arith.constant 0 : i32
    %c0_i32_1 = arith.constant 0 : i32
    return %c0_i32, %c0_i32_0 : i32, i32
  }
  func.func @transform_2(%arg0: i32, %arg1: i32) -> (i32, i32) {
    %c0_i32 = arith.constant 0 : i32
    %c0_i32_0 = arith.constant 0 : i32
    %c0_i32_1 = arith.constant 0 : i32
    return %c0_i32, %c0_i32_0 : i32, i32
  }
  func.func @transform_3(%arg0: i32, %arg1: i32) -> (i32, i32) {
    %c0_i32 = arith.constant 0 : i32
    %c0_i32_0 = arith.constant 0 : i32
    return %c0_i32, %arg1 : i32, i32
  }
  func.func @transform_4(%arg0: i32, %arg1: i32) -> (i32, i32) {
    %c0_i32 = arith.constant 0 : i32
    %c0_i32_0 = arith.constant 0 : i32
    return %c0_i32, %arg1 : i32, i32
  }
  func.func @transform_5(%arg0: i32, %arg1: i32) -> (i32, i32) {
    %c0_i32 = arith.constant 0 : i32
    return %arg0, %arg1 : i32, i32
  }
}

</mosaic_0001>

<llo_original>
// kernel: tpu_custom_call.1
$region0: #{tpu_custom_call.1}
  #allocation0 [shape = 'u32[]', space=smem, size = 0x4, offset = 0x4, fixed_abs, tag = 'smem constant byte address 0x4 - core index']
  #allocation1 [shape = 'u32[144,128]{1,0:T(1,128)}', space=vmem, size = 0x12000, scoped, tag = 'internal scratch']
  #allocation2 [shape = 'f32[16,128]{1,0:T(8,128)}', space=vmem, size = 0x2000, scoped, tag = 'scratch operand']
  %s0 = inlined_call_operand.hbm [shape: f32[16,128], index: 0, kind: input, shape index: {}]
  %s1 = inlined_call_operand.vmem [shape: f32[1,128], index: 1, kind: input, shape index: {}]
  %s2 = inlined_call_operand.vmem [shape: f32[1,128], index: 2, kind: input, shape index: {}]
  %s3 = inlined_call_operand.hbm [shape: f32[128,128], index: 3, kind: input, shape index: {}]
  %s4 = inlined_call_operand.vmem [shape: f32[1,128], index: 4, kind: input, shape index: {}]
  %s5 = inlined_call_operand.hbm [shape: f32[16,128], index: 5, kind: output, shape index: {}]
  %s6 = sld [smem:[#allocation0]]
  $region42: #{tpu_custom_call.1} parent=0
    _
  %s8 = ssub.s32 1, %s6
  %s9 = scalar_select 0, %s8, %s6
  $region1: #{tpu_custom_call.1} parent=0
    #allocation3 [shape = 'u8[8192]{0}', space=vmem, size = 0x2000, scoped, tag = 'input window, operand 0, single buffered']
    #allocation4 [shape = 's32[1]{0}', space=sflag, size = 0x4, scoped, tag = 'scoped memory for tpu_custom_call.1']
    #allocation5 [shape = 's32[1]{0}', space=sflag, size = 0x4, scoped, tag = 'scoped memory for tpu_custom_call.1']
    #allocation6 [shape = 'u8[65536]{0}', space=vmem, size = 0x10000, scoped, tag = 'input window, operand 3, single buffered']
    #allocation7 [shape = 's32[1]{0}', space=sflag, size = 0x4, scoped, tag = 'scoped memory for tpu_custom_call.1']
    #allocation8 [shape = 'u8[8192]{0}', space=vmem, size = 0x2000, scoped, tag = 'output window, operand 0, single buffered']
    %10 = vsyncpa [#allocation4], 0
    %11 = vsyncpa [#allocation7], 0
    %12 = vsyncpa [#allocation5], 0
    // Predicated region
    $region2: #{tpu_custom_call.1} parent=1 // pred_check
      _
    $region3: #{tpu_custom_call.1} parent=1 // pred_check_branch
      %14 = sbr.rel (0) target = $region5
    $region4: #{tpu_custom_call.1} parent=1 // pred_region
      %s16 = ssub.s32 256, 256
      %17 = vsyncadd [#allocation4], %s16
      %s18 = sshll.u32 [#allocation3], 4
      %s19 = int_to_ptr.vmem [resolvable:$true] %s18
      %24 = dma.hbm_to_vmem [thread:$0]  %s0, 256, %s19, [#allocation4], 128, 128, 8
    $region5: #{tpu_custom_call.1} parent=1 // pred_fallthru
      _
    // Predicated region
    $region6: #{tpu_custom_call.1} parent=1 // pred_check
      _
    $region7: #{tpu_custom_call.1} parent=1 // pred_check_branch
      %26 = sbr.rel (0) target = $region9
    $region8: #{tpu_custom_call.1} parent=1 // pred_region
      _
    $region9: #{tpu_custom_call.1} parent=1 // pred_fallthru
      _
    // Predicated region
    $region10: #{tpu_custom_call.1} parent=1 // pred_check
      _
    $region11: #{tpu_custom_call.1} parent=1 // pred_check_branch
      %28 = sbr.rel (0) target = $region13
    $region12: #{tpu_custom_call.1} parent=1 // pred_region
      _
    $region13: #{tpu_custom_call.1} parent=1 // pred_fallthru
      _
    // Predicated region
    $region14: #{tpu_custom_call.1} parent=1 // pred_check
      _
    $region15: #{tpu_custom_call.1} parent=1 // pred_check_branch
      %30 = sbr.rel (0) target = $region17
    $region16: #{tpu_custom_call.1} parent=1 // pred_region
      %s32 = ssub.s32 2048, 2048
      %33 = vsyncadd [#allocation7], %s32
      %s34 = sshll.u32 [#allocation6], 4
      %s35 = int_to_ptr.vmem [resolvable:$true] %s34
      %40 = dma.hbm_to_vmem [thread:$0]  %s3, 2048, %s35, [#allocation7], 128, 128, 8
    $region17: #{tpu_custom_call.1} parent=1 // pred_fallthru
      _
    // Predicated region
    $region18: #{tpu_custom_call.1} parent=1 // pred_check
      _
    $region19: #{tpu_custom_call.1} parent=1 // pred_check_branch
      %42 = sbr.rel (0) target = $region21
    $region20: #{tpu_custom_call.1} parent=1 // pred_region
      _
    $region21: #{tpu_custom_call.1} parent=1 // pred_fallthru
      _
    // Predicated region
    $region22: #{tpu_custom_call.1} parent=1 // pred_check
      _
    $region23: #{tpu_custom_call.1} parent=1 // pred_check_branch
      %44 = sbr.rel (0) target = $region25
    $region24: #{tpu_custom_call.1} parent=1 // pred_region
      %45 = dma.done [#allocation4], 256
    $region25: #{tpu_custom_call.1} parent=1 // pred_fallthru
      _
    // Predicated region
    $region26: #{tpu_custom_call.1} parent=1 // pred_check
      _
    $region27: #{tpu_custom_call.1} parent=1 // pred_check_branch
      %47 = sbr.rel (0) target = $region29
    $region28: #{tpu_custom_call.1} parent=1 // pred_region
      %48 = dma.done [#allocation7], 2048
    $region29: #{tpu_custom_call.1} parent=1 // pred_fallthru
      _
    %p49 = scmp.eq.s32.totalorder 0, 0
    // Predicated region
    $region30: #{tpu_custom_call.1} parent=1 // pred_check
      %p50 = pneg %p49
    $region31: #{tpu_custom_call.1} parent=1 // pred_check_branch
      %52 = sbr.rel (%p50) target = $region33
    $region32: #{tpu_custom_call.1} parent=1 // pred_region
      %v53 = vld [vmem:[#allocation3] sm:$0xff]
      %v54 = vld [vmem:[#allocation3 + $0x8] sm:$0xff]
      %55 = vadd.xlane.f32.xlu0 %v53
      %v56 = vpop.xlane.xlu0 %55
      %57 = vadd.xlane.f32.xlu0 %v54
      %v58 = vpop.xlane.xlu0 %57
      %v59 = vrcp.pop 128.0
      %v60 = vmul.f32 %v56, %v59
      %v61 = vmul.f32 %v58, %v59
      %v62 = vsub.f32 %v53, %v60
      %v63 = vsub.f32 %v54, %v61
      %v64 = vmul.f32 %v62, %v62
      %v65 = vmul.f32 %v63, %v63
      %66 = vadd.xlane.f32.xlu0 %v64
      %v67 = vpop.xlane.xlu0 %66
      %68 = vadd.xlane.f32.xlu0 %v65
      %v69 = vpop.xlane.xlu0 %68
      %v70 = vmul.f32 %v67, %v59
      %v71 = vmul.f32 %v69, %v59
      %v72 = vadd.f32 %v70, 1e-05
      %v73 = vadd.f32 %v71, 1e-05
      %v74 = vrsqrt.pop %v72
      %v75 = vrsqrt.pop %v73
      %v76 = vmul.f32 %v62, %v74
      %v77 = vmul.f32 %v63, %v75
      %v78 = vld [vmem:[%s1] sm:$0x1]
      %v80 = vlaneseq
      %v81 = vshrl.u32 %v80, 7
      %v82 = vsub.s32 0, %v81
      %v83 = vrot.slane %v78, %v82
      %v85 = vmul.f32 %v76, %v83
      %v86 = vmul.f32 %v77, %v83
      %v87 = vld [vmem:[%s2] sm:$0x1]
      %v89 = vlaneseq
      %v90 = vshrl.u32 %v89, 7
      %v91 = vsub.s32 0, %v90
      %v92 = vrot.slane %v87, %v91
      %v94 = vadd.f32 %v85, %v92
      %v95 = vadd.f32 %v86, %v92
      %96 = vst [vmem:[#allocation2] sm:$0xff] %v94
      %97 = vst [vmem:[#allocation2 + $0x8] sm:$0xff] %v95
    $region33: #{tpu_custom_call.1} parent=1 // pred_fallthru
      _
    %v98 = vld [vmem:[#allocation2] sm:$0xff]
    %v99 = vld [vmem:[#allocation2 + $0x8] sm:$0xff]
    %v100 = vld [vmem:[#allocation6] sm:$0xff]
    %v101 = vld [vmem:[#allocation6 + $0x8] sm:$0xff]
    %v102 = vld [vmem:[#allocation6 + $0x10] sm:$0xff]
    %v103 = vld [vmem:[#allocation6 + $0x18] sm:$0xff]
    %v104 = vld [vmem:[#allocation6 + $0x20] sm:$0xff]
    %v105 = vld [vmem:[#allocation6 + $0x28] sm:$0xff]
    %v106 = vld [vmem:[#allocation6 + $0x30] sm:$0xff]
    %v107 = vld [vmem:[#allocation6 + $0x38] sm:$0xff]
    %v108 = vld [vmem:[#allocation6 + $0x40] sm:$0xff]
    %v109 = vld [vmem:[#allocation6 + $0x48] sm:$0xff]
    %v110 = vld [vmem:[#allocation6 + $0x50] sm:$0xff]
    %v111 = vld [vmem:[#allocation6 + $0x58] sm:$0xff]
    %v112 = vld [vmem:[#allocation6 + $0x60] sm:$0xff]
    %v113 = vld [vmem:[#allocation6 + $0x68] sm:$0xff]
    %v114 = vld [vmem:[#allocation6 + $0x70] sm:$0xff]
    %v115 = vld [vmem:[#allocation6 + $0x78] sm:$0xff]
    %v116 = vld [vmem:[%s4] sm:$0x1]
    %v118 = vlaneseq
    %v119 = vshrl.u32 %v118, 7
    %v120 = vsub.s32 0, %v119
    %v121 = vrot.slane %v116, %v120
    %123 = vmatprep.subr.mxu0 0.0
    %124 = vmatpush1.msra.mxu0 %v115
    %125 = vmatprep.subr.mxu0 0.0
    %126 = vmatpush1.msra.mxu0 %v114
    %127 = vmatprep.subr.mxu0 0.0
    %128 = vmatpush1.msra.mxu0 %v113
    %129 = vmatprep.subr.mxu0 0.0
    %130 = vmatpush1.msra.mxu0 %v112
    %131 = vmatprep.subr.mxu0 0.0
    %132 = vmatpush1.msra.mxu0 %v111
    %133 = vmatprep.subr.mxu0 0.0
    %134 = vmatpush1.msra.mxu0 %v110
    %135 = vmatprep.subr.mxu0 0.0
    %136 = vmatpush1.msra.mxu0 %v109
    %137 = vmatprep.subr.mxu0 0.0
    %138 = vmatpush1.msra.mxu0 %v108
    %139 = vmatprep.subr.mxu0 0.0
    %140 = vmatpush1.msra.mxu0 %v107
    %141 = vmatprep.subr.mxu0 0.0
    %142 = vmatpush1.msra.mxu0 %v106
    %143 = vmatprep.subr.mxu0 0.0
    %144 = vmatpush1.msra.mxu0 %v105
    %145 = vmatprep.subr.mxu0 0.0
    %146 = vmatpush1.msra.mxu0 %v104
    %147 = vmatprep.subr.mxu0 0.0
    %148 = vmatpush1.msra.mxu0 %v103
    %149 = vmatprep.subr.mxu0 0.0
    %150 = vmatpush1.msra.mxu0 %v102
    %151 = vmatprep.subr.mxu0 0.0
    %152 = vmatpush1.msra.mxu0 %v101
    %153 = vmatprep.subr.mxu0 0.0
    %154 = vmatpush1.msra.mxu0 %v100
    %155 = vmatprep.subr.mxu0 0.0
    %156 = vmatpush2.msra.mxu0 0.0
    %157 = vmatprep.subr.mxu0 0.0
    %158 = vmatpush2.msra.mxu0 0.0
    %159 = vmatprep.subr.mxu0 0.0
    %160 = vmatpush2.msra.mxu0 0.0
    %161 = vmatprep.subr.mxu0 0.0
    %162 = vmatpush2.msra.mxu0 0.0
    %163 = vmatprep.subr.mxu0 0.0
    %164 = vmatpush2.msra.mxu0 0.0
    %165 = vmatprep.subr.mxu0 0.0
    %166 = vmatpush2.msra.mxu0 0.0
    %167 = vmatprep.subr.mxu0 0.0
    %168 = vmatpush2.msra.mxu0 0.0
    %169 = vmatprep.subr.mxu0 0.0
    %170 = vmatpush2.msra.mxu0 0.0
    %171 = vmatprep.subr.mxu0 0.0
    %172 = vmatpush2.msra.mxu0 0.0
    %173 = vmatprep.subr.mxu0 0.0
    %174 = vmatpush2.msra.mxu0 0.0
    %175 = vmatprep.subr.mxu0 0.0
    %176 = vmatpush2.msra.mxu0 0.0
    %177 = vmatprep.subr.mxu0 0.0
    %178 = vmatpush2.msra.mxu0 0.0
    %179 = vmatprep.subr.mxu0 0.0
    %180 = vmatpush2.msra.mxu0 0.0
    %181 = vmatprep.subr.mxu0 0.0
    %182 = vmatpush2.msra.mxu0 0.0
    %183 = vmatprep.subr.mxu0 0.0
    %184 = vmatpush2.msra.mxu0 0.0
    %185 = vmatprep.subr.mxu0 0.0
    %186 = vmatpush2.msra.mxu0 0.0
    %187 = vmatprep.mubr.f32.mxu0 0.0
    %188 = vmatmul.mubr.f32.gmra.mxu0 %v98
    %v189 = vpop.f32.mrf.mxu0
    %v190 = vadd.f32 %v121, %v189
    %v191 = vpop.f32.mrf.mxu0
    %192 = vmatprep.mubr.f32.mxu0 0.0
    %193 = vmatmul.mubr.f32.gmra.mxu0 %v99
    %v194 = vpop.f32.mrf.mxu0
    %v195 = vadd.f32 %v121, %v194
    %v196 = vpop.f32.mrf.mxu0
    %197 = vdwg.mxu0
    %198 = vst [vmem:[#allocation8] sm:$0xff] %v190
    %199 = vst [vmem:[#allocation8 + $0x8] sm:$0xff] %v195
    // Predicated region
    $region34: #{tpu_custom_call.1} parent=1 // pred_check
      _
    $region35: #{tpu_custom_call.1} parent=1 // pred_check_branch
      %201 = sbr.rel (0) target = $region37
    $region36: #{tpu_custom_call.1} parent=1 // pred_region
      %s203 = ssub.s32 256, 256
      %204 = vsyncadd [#allocation5], %s203
      %s205 = sshll.u32 [#allocation8], 4
      %s206 = int_to_ptr.vmem [resolvable:$true] %s205
      %211 = dma.vmem_to_hbm [thread:$0]  %s206, 256, %s5, [#allocation5], 128, 128, 8
    $region37: #{tpu_custom_call.1} parent=1 // pred_fallthru
      _
    // Predicated region
    $region38: #{tpu_custom_call.1} parent=1 // pred_check
      _
    $region39: #{tpu_custom_call.1} parent=1 // pred_check_branch
      %213 = sbr.rel (0) target = $region41
    $region40: #{tpu_custom_call.1} parent=1 // pred_region
      %214 = dma.done [#allocation5], 256
    $region41: #{tpu_custom_call.1} parent=1 // pred_fallthru
      _
    %215 = vsyncpa [#allocation4], 1
    %216 = vsyncpa [#allocation7], 1
    %217 = vsyncpa [#allocation5], 1

</llo_original>
